<compile_context>
chip_gen: v5e
topology: v5e:2x2
jax: 0.10.0
libtpu: 0.0.40
codegen_flags: <defaults>
</compile_context>

<pallas_src>
import functools

import jax
import jax.numpy as jnp
from jax import lax
from jax.experimental import pallas as pl
from jax.experimental.pallas import tpu as pltpu


# --------------------------------------------------------------------------
# Tile-size / VMEM helpers (generation aware).
# --------------------------------------------------------------------------
def _cdiv(a, b):
    return -(-a // b)


def _round_up(x, m):
    return _cdiv(x, m) * m


def _vmem_budget_bytes():
    """~75% of this generation's physical VMEM (96 MiB on 128 MiB parts,
    48 MiB on v7x).  Conservative 64 MiB fallback if the query fails."""
    cap = 64 * 1024 * 1024
    try:
        info = pltpu.get_tpu_info()
        cap = int(getattr(info, "vmem_capacity_bytes", cap)) or cap
    except Exception:
        pass
    return max(int(cap * 3 // 4), 24 * 1024 * 1024)


_F_BLOCK_BUFFERS = 3        # pipeline depth requested for the F stream
_TARGET_TILE_BYTES = 8 * 1024 * 1024   # aim ~8 MiB of F per grid step


def _pick_tile_n(n, per_col_bytes, fixed_bytes, budget, tile_col_bytes):
    """Pixel-axis tile length (multiple of 128 lanes, or the full extent).

    per_col_bytes : total buffered VMEM bytes per pixel column (all streams
                    times their buffer counts).
    fixed_bytes   : tn-independent residents (accumulators, (C,C) blocks).
    tile_col_bytes: bytes of ONE F tile per pixel column (DMA amortization)."""
    avail = max(budget - fixed_bytes, 2 * 1024 * 1024)
    tn = min(avail // max(per_col_bytes, 1),
             _TARGET_TILE_BYTES // max(tile_col_bytes, 1))
    tn = max(128, (tn // 128) * 128)
    if tn >= n:
        return n                      # one full-extent block (no 128 constraint)
    nt = _cdiv(n, tn)                 # balance tiles to limit ragged waste
    return min(tn, _round_up(_cdiv(n, nt), 128))


def _f_spec(c, tn, index_map, steps):
    """(C, tn) F-stream BlockSpec, triple-buffered when the grid is deep enough."""
    if steps >= _F_BLOCK_BUFFERS:
        try:
            return pl.BlockSpec((c, tn), index_map,
                                pipeline_mode=pl.Buffered(_F_BLOCK_BUFFERS))
        except Exception:   # pipeline_mode / Buffered unavailable -> default 2x
            pass
    return pl.BlockSpec((c, tn), index_map)


# --------------------------------------------------------------------------
# Pallas kernels.
# --------------------------------------------------------------------------
def _gram_accum_kernel(f_ref, out_ref, acc_ref, *, n_true, tn, kk, need_mask):
    """Accumulate F F^T over the pixel-tile axis (axis 1 of the grid); each
    split (axis 0, megacore-parallel) writes its own raw f32 partial sum."""
    k = pl.program_id(1)

    @pl.when(k == 0)
    def _():
        acc_ref[...] = jnp.zeros_like(acc_ref)

    f = f_ref[...]                                     # native (bf16) -> MXU
    if need_mask:
        # Ragged last tile (and the at-most-one duplicated clamp tile): zero
        # every column whose global pixel index is >= n_true before F F^T.
        gblk = pl.program_id(0) * kk + k
        col = lax.broadcasted_iota(jnp.int32, f.shape, 1) + gblk * tn
        f = jnp.where(col < n_true, f, jnp.zeros_like(f))
    acc_ref[...] += lax.dot_general(
        f, f, (((1,), (1,)), ((), ())), preferred_element_type=jnp.float32)

    @pl.when(k == kk - 1)
    def _():
        out_ref[...] = acc_ref[...]


def _gram_bwd_kernel(sd_ref, f_ref, df_ref):
    """dF tile = scaled_diff @ F tile (scalar coeff pre-folded into sdiff;
    sdiff already cast to F's dtype so the F tile is never promoted)."""
    df_ref[...] = jnp.dot(
        sd_ref[...], f_ref[...], preferred_element_type=jnp.float32
    ).astype(df_ref.dtype)


# --------------------------------------------------------------------------
# pallas_call wrappers.
# --------------------------------------------------------------------------
def _gram_partials(f2d):
    """Raw (split, C, C) f32 partial sums of F F^T (no /N)."""
    c, n = f2d.shape
    item = jnp.dtype(f2d.dtype).itemsize
    budget = _vmem_budget_bytes()
    fixed = 3 * c * c * 4                                   # acc + 2 out bufs
    tn = _pick_tile_n(n, per_col_bytes=_F_BLOCK_BUFFERS * c * item,
                      fixed_bytes=fixed, budget=budget, tile_col_bytes=c * item)
    nt = _cdiv(n, tn)
    split = 2 if nt >= 2 else 1         # v7x: one half of the tiles per TC
    kk = _cdiv(nt, split)
    need_mask = (n % tn != 0) or (split * kk != nt)

    def f_index(s, k):
        # Clamp so the (at most one) overhang block re-reads the last real
        # tile; its contribution is fully masked to zero in the kernel.
        return (0, jnp.minimum(s * kk + k, nt - 1))

    cost = pl.CostEstimate(flops=2 * c * c * n, transcendentals=0,
                           bytes_accessed=c * n * item + split * c * c * 4)
    return pl.pallas_call(
        functools.partial(_gram_accum_kernel, n_true=n, tn=tn, kk=kk,
                          need_mask=need_mask),
        out_shape=jax.ShapeDtypeStruct((split, c, c), jnp.float32),
        grid_spec=pltpu.PrefetchScalarGridSpec(
            num_scalar_prefetch=0,
            grid=(split, kk),
            in_specs=[_f_spec(c, tn, f_index, kk)],
            out_specs=pl.BlockSpec((None, c, c), lambda s, k: (s, 0, 0)),
            scratch_shapes=[pltpu.VMEM((c, c), jnp.float32)]),
        compiler_params=pltpu.CompilerParams(
            dimension_semantics=("parallel", "arbitrary"),
            vmem_limit_bytes=budget),
        cost_estimate=cost,
    )(f2d)


def gram_matrix(f2d):
    """G = (F F^T)/N of a (C, N) activation (tiny f32 epilogue in JAX)."""
    n = f2d.shape[1]
    return _gram_partials(f2d).sum(axis=0) * jnp.float32(1.0 / n)


def _gram_backward(sdiff, f2d):
    """dF = sdiff @ F, tiled (parallel) over the pixel axis, no padding."""
    c, n = f2d.shape
    item = jnp.dtype(f2d.dtype).itemsize
    sdiff = sdiff.astype(f2d.dtype)
    budget = _vmem_budget_bytes()
    fixed = 2 * c * c * item                                # resident sdiff bufs
    per_col = (_F_BLOCK_BUFFERS + 2) * c * item             # F bufs + 2 dF bufs
    tn = _pick_tile_n(n, per_col_bytes=per_col, fixed_bytes=fixed,
                      budget=budget, tile_col_bytes=c * item)
    nt = _cdiv(n, tn)
    cost = pl.CostEstimate(flops=2 * c * c * n, transcendentals=0,
                           bytes_accessed=2 * c * n * item + c * c * item)
    return pl.pallas_call(
        _gram_bwd_kernel,
        out_shape=jax.ShapeDtypeStruct((c, n), f2d.dtype),
        grid_spec=pltpu.PrefetchScalarGridSpec(
            num_scalar_prefetch=0,
            grid=(nt,),
            in_specs=[pl.BlockSpec((c, c), lambda k: (0, 0)),
                      _f_spec(c, tn, lambda k: (0, k), nt)],
            out_specs=pl.BlockSpec((c, tn), lambda k: (0, k))),
        compiler_params=pltpu.CompilerParams(
            dimension_semantics=("parallel",),     # independent tiles (megacore)
            vmem_limit_bytes=budget),
        cost_estimate=cost,
    )(sdiff, f2d)


# --------------------------------------------------------------------------
# Plain-JAX glue: tiny stand-in VGG (bf16), gaussian pyramid (bilinear approx).
# --------------------------------------------------------------------------
_ACT_DTYPE = jnp.bfloat16   # activations reach the gram kernels in bf16


def init_vgg_params(key):
    k1, k2 = jax.random.split(key)
    return {
        "w1": 0.1 * jax.random.normal(k1, (8, 3, 3, 3), jnp.float32),    # OIHW
        "b1": jnp.zeros((8,), jnp.float32),
        "w2": 0.1 * jax.random.normal(k2, (16, 8, 3, 3), jnp.float32),   # OIHW
        "b2": jnp.zeros((16,), jnp.float32),
    }


def vgg_forward(x, params, layers):
    """NCHW bf16 conv stack standing in for the external VGG feature extractor."""
    acts = {}
    h = x.astype(_ACT_DTYPE)
    h = lax.conv_general_dilated(
        h, params["w1"].astype(_ACT_DTYPE), (1, 1), "SAME",
        dimension_numbers=("NCHW", "OIHW", "NCHW"))
    h = jax.nn.relu(h + params["b1"].astype(_ACT_DTYPE)[None, :, None, None])
    acts["r11"] = h
    h = lax.conv_general_dilated(
        h, params["w2"].astype(_ACT_DTYPE), (1, 1), "SAME",
        dimension_numbers=("NCHW", "OIHW", "NCHW"))
    h = jax.nn.relu(h + params["b2"].astype(_ACT_DTYPE)[None, :, None, None])
    acts["r21"] = h
    return [acts[l] for l in layers]


def make_gaussian_pyramid(x, span, mips):
    # TODO(synk): true gaussian blur before downsample omitted; bilinear
    # resize stands in for utils.make_gaussian_pyramid.
    b, c, h, w = x.shape
    pyr = []
    for m in range(mips):
        s = span ** m
        nh, nw = max(int(round(h * s)), 4), max(int(round(w * s)), 4)
        pyr.append(jax.image.resize(x, (b, c, nh, nw), method="linear"))
    return pyr


# --------------------------------------------------------------------------
# StyleGramGuide (JAX/Pallas version).
# --------------------------------------------------------------------------
class StyleGramGuideTPU:
    def __init__(self, styles, vgg_params, style_mips, mip_weights, layers,
                 layer_weights, style_pyramid_span, style_zoom, weight,
                 mask_layers=()):
        self.name = "style gram guide"
        self.styles = styles                    # list of (tensor, target_map)
        self.vgg_params = vgg_params
        self.style_mips = style_mips
        self.mip_weights = mip_weights
        self.layers = layers
        self.layer_weight = layer_weights
        self.style_pyramid_span = style_pyramid_span
        self.zoom = style_zoom
        self.weight = weight
        self.mask_layers = list(mask_layers)
        self.target = []
        self.target_maps = []
        self._jit_forward = None

    # ---------------- target Grams (run once) ----------------
    def prepare(self):
        for style_tensor, target_map in self.styles:
            if target_map is not None and target_map.size != 0:
                self.target_maps += [target_map] * len(self.layers)
            else:
                self.target_maps += [None] * len(self.layers)
            # TODO(synk): style_zoom resize (utils.zoom_image) not exercised
            # here; zoom == 1.0 in the example.
            pyr = make_gaussian_pyramid(
                style_tensor, self.style_pyramid_span, self.style_mips)
            acts_per_mip = [
                vgg_forward(m, self.vgg_params, self.layers) for m in pyr]
            for li in range(len(self.layers)):
                gram_pyramid = []
                for mi in range(self.style_mips):
                    f = acts_per_mip[mi][li]
                    _, c, h, w = f.shape
                    gram_pyramid.append(gram_matrix(f[0].reshape(c, h * w)))
                self.target.append(gram_pyramid)

    # ---------------- shared feature extraction ----------------
    def _feature_2d(self, opt_tensor):
        """Pyramid + VGG run ONCE; returns feats[layer][mip] = (C, N) bf16."""
        pyr = make_gaussian_pyramid(
            opt_tensor, self.style_pyramid_span, self.style_mips)
        acts_per_mip = [
            vgg_forward(m, self.vgg_params, self.layers) for m in pyr]
        feats = []
        for li in range(len(self.layers)):
            per_mip = []
            for mi in range(self.style_mips):
                f = acts_per_mip[mi][li]
                _, c, h, w = f.shape
                per_mip.append(f[0].reshape(c, h * w))
            feats.append(per_mip)
        return feats

    # ---------------- jitted loss + per-layer gradients ----------------
    def _forward_impl(self, opt_tensor, targets, target_maps):
        num_layers = len(self.layers)
        feats, vjp_feat = jax.vjp(self._feature_2d, opt_tensor)

        layer_losses = []
        grads = []
        for li, layer_name in enumerate(self.layers):
            lloss = jnp.float32(0.0)
            # Activation cotangents: analytic gram-MSE backward for this
            # layer's mips, zeros elsewhere -> no zero-cotangent gram kernels.
            cots = [[jnp.zeros_like(feats[lj][mj])
                     for mj in range(self.style_mips)]
                    for lj in range(num_layers)]
            for mi in range(self.style_mips):
                f2d = feats[li][mi]
                c, n = f2d.shape
                gram = _gram_partials(f2d).sum(axis=0) * jnp.float32(1.0 / n)
                diff = gram - targets[li][mi].astype(jnp.float32)  # symmetric
                lloss = lloss + self.mip_weights[mi] * jnp.mean(diff * diff)
                # d(weighted layer loss)/dF = coeff * diff @ F, with the scalar
                # folded into the (C,C) matrix (diff symmetric -> 4/(N C^2)).
                coeff = (self.weight * self.layer_weight[li]
                         * self.mip_weights[mi] * 4.0 / (float(n) * c * c))
                sdiff = (jnp.float32(coeff) * diff).astype(f2d.dtype)
                cots[li][mi] = _gram_backward(sdiff, f2d)
            layer_losses.append(
                jnp.float32(self.weight * self.layer_weight[li]) * lloss)

            (g,) = vjp_feat(cots)       # per-layer pull-back (API requirement)
            tmap = target_maps[li]
            if tmap is not None and layer_name in self.mask_layers:
                g = g * tmap[0, 0][None, None, :, :]
            grads.append(g)

        total_loss = jnp.sum(jnp.stack(layer_losses))
        return grads, total_loss

    def forward(self, opt_tensor):
        if self._jit_forward is None:
            self._jit_forward = jax.jit(self._forward_impl)
        num_layers = len(self.layers)
        grads, total_loss = self._jit_forward(
            opt_tensor, self.target[:num_layers], self.target_maps[:num_layers])
        return list(grads), total_loss


# --------------------------------------------------------------------------
if __name__ == "__main__":
    key = jax.random.PRNGKey(0)
    k_vgg, k_opt, k_style = jax.random.split(key, 3)

    vgg_params = init_vgg_params(k_vgg)
    opt_tensor = jax.random.uniform(k_opt, (1, 3, 16, 16), jnp.float32)
    style_tensor = jax.random.uniform(k_style, (1, 3, 16, 16), jnp.float32)
    target_map = 0.5 * jnp.ones((1, 1, 16, 16), jnp.float32)

    guide = StyleGramGuideTPU(
        styles=[(style_tensor, target_map)],
        vgg_params=vgg_params,
        style_mips=2,
        mip_weights=[1.0, 0.5],
        layers=["r11", "r21"],
        layer_weights=[1.0, 0.5],
        style_pyramid_span=0.5,
        style_zoom=1.0,
        weight=1.0,
        mask_layers=["r11"],
    )
    guide.prepare()

    grads, total_loss = guide.forward(opt_tensor)
    jax.block_until_ready(grads)
    jax.block_until_ready(total_loss)

    assert len(grads) == 2
    assert grads[0].shape == opt_tensor.shape
    assert grads[1].shape == opt_tensor.shape
    assert jnp.isfinite(total_loss)
    print("KERNEL_OK")
</pallas_src>

<mosaic_0001>
module attributes {stable_mosaic.version = 11 : i64} {
  func.func @_gram_accum_kernel(%arg0: i32, %arg1: i32, %arg2: memref<8x256xbf16, #tpu.memory_space<vmem>>, %arg3: memref<1x8x8xf32, #tpu.memory_space<vmem>>, %arg4: memref<8x8xf32, #tpu.memory_space<vmem>>) attributes {dimension_semantics = [#tpu.dimension_semantics<parallel>, #tpu.dimension_semantics<arbitrary>], iteration_bounds = array<i64: 1, 1>, scalar_prefetch = 0 : i64, scratch_operands = 1 : i64, tpu.core_type = #tpu.core_type<tc>, window_params = [{transform_indices = @transform_0, window_bounds = array<i64: 8, 256>}, {transform_indices = @transform_1, window_bounds = array<i64: 1, 8, 8>}]} {
    %c0_i32 = arith.constant 0 : i32
    %0 = arith.cmpi eq, %arg1, %c0_i32 : i32
    %1 = arith.extui %0 : i1 to i32
    %c0_i32_0 = arith.constant 0 : i32
    %2 = arith.cmpi ne, %1, %c0_i32_0 : i32
    scf.if %2 {
      %cst_8 = arith.constant 0.000000e+00 : f32
      %11 = vector.broadcast %cst_8 : f32 to vector<8x8xf32>
      %c0_9 = arith.constant 0 : index
      %c0_10 = arith.constant 0 : index
      %12 = vector.load %arg4[%c0_9, %c0_10] : memref<8x8xf32, #tpu.memory_space<vmem>>, vector<8x8xf32>
      tpu.vector_store %arg4[%c0_9, %c0_10], %11 {strides = array<i32>} : memref<8x8xf32, #tpu.memory_space<vmem>>, vector<8x8xf32>,
    } else {
    }
    %c0 = arith.constant 0 : index
    %c0_1 = arith.constant 0 : index
    %3 = vector.load %arg2[%c0, %c0_1] : memref<8x256xbf16, #tpu.memory_space<vmem>>, vector<8x256xbf16>
    %c0_2 = arith.constant 0 : index
    %c0_3 = arith.constant 0 : index
    %4 = vector.load %arg4[%c0_2, %c0_3] : memref<8x8xf32, #tpu.memory_space<vmem>>, vector<8x8xf32>
    %cst = arith.constant dense<0.000000e+00> : vector<8x8xf32>
    %5 = tpu.matmul %3, %3, %cst {dimension_numbers = #tpu.dot_dimension_numbers<[1], [1], [0], [0], [0, 0, 1, 0], [], []>} : vector<8x256xbf16>, vector<8x256xbf16>, vector<8x8xf32> -> vector<8x8xf32>
    %6 = arith.addf %4, %5 : vector<8x8xf32>
    %c0_4 = arith.constant 0 : index
    %c0_5 = arith.constant 0 : index
    %7 = vector.load %arg4[%c0_4, %c0_5] : memref<8x8xf32, #tpu.memory_space<vmem>>, vector<8x8xf32>
    tpu.vector_store %arg4[%c0_4, %c0_5], %6 {strides = array<i32>} : memref<8x8xf32, #tpu.memory_space<vmem>>, vector<8x8xf32>,
    %c0_i32_6 = arith.constant 0 : i32
    %8 = arith.cmpi eq, %arg1, %c0_i32_6 : i32
    %9 = arith.extui %8 : i1 to i32
    %c0_i32_7 = arith.constant 0 : i32
    %10 = arith.cmpi ne, %9, %c0_i32_7 : i32
    scf.if %10 {
      %c0_8 = arith.constant 0 : index
      %c0_9 = arith.constant 0 : index
      %11 = vector.load %arg4[%c0_8, %c0_9] : memref<8x8xf32, #tpu.memory_space<vmem>>, vector<8x8xf32>
      %c0_10 = arith.constant 0 : index
      %c0_11 = arith.constant 0 : index
      %c0_12 = arith.constant 0 : index
      %12 = vector.load %arg3[%c0_10, %c0_11, %c0_12] : memref<1x8x8xf32, #tpu.memory_space<vmem>>, vector<1x8x8xf32>
      %13 = vector.shape_cast %12 : vector<1x8x8xf32> to vector<8x8xf32>
      %14 = vector.shape_cast %11 : vector<8x8xf32> to vector<1x8x8xf32>
      tpu.vector_store %arg3[%c0_10, %c0_11, %c0_12], %14 {strides = array<i32>} : memref<1x8x8xf32, #tpu.memory_space<vmem>>, vector<1x8x8xf32>,
    } else {
    }
    return
  }
  func.func @transform_0(%arg0: i32, %arg1: i32) -> (i32, i32) {
    %c1_i32 = arith.constant 1 : i32
    %0 = arith.muli %arg0, %c1_i32 : i32
    %1 = arith.addi %0, %arg1 : i32
    %c0_i32 = arith.constant 0 : i32
    %2 = arith.minsi %1, %c0_i32 : i32
    %c0_i32_0 = arith.constant 0 : i32
    %c0_i32_1 = arith.constant 0 : i32
    return %c0_i32_0, %2 : i32, i32
  }
  func.func @transform_1(%arg0: i32, %arg1: i32) -> (i32, i32, i32) {
    %c0_i32 = arith.constant 0 : i32
    %c0_i32_0 = arith.constant 0 : i32
    %c0_i32_1 = arith.constant 0 : i32
    return %arg0, %c0_i32, %c0_i32_0 : i32, i32, i32
  }
}

</mosaic_0001>

<llo_original>
// kernel: tpu_custom_call.1
$region0: #{tpu_custom_call.1}
  #allocation0 [shape = 'u32[]', space=smem, size = 0x4, offset = 0x4, fixed_abs, tag = 'smem constant byte address 0x4 - core index']
  #allocation1 [shape = 'u32[72,128]{1,0:T(1,128)}', space=vmem, size = 0x9000, scoped, tag = 'internal scratch']
  #allocation2 [shape = 'f32[8,8]{1,0:T(8,128)}', space=vmem, size = 0x1000, scoped, tag = 'scratch operand']
  %s0 = inlined_call_operand.hbm [shape: bf16[8,256], index: 0, kind: input, shape index: {}]
  %s1 = inlined_call_operand.hbm [shape: f32[1,8,8], index: 1, kind: output, shape index: {}]
  %s2 = sld [smem:[#allocation0]]
  $region26: #{tpu_custom_call.1} parent=0
    _
  %s4 = ssub.s32 1, %s2
  %s5 = scalar_select 0, %s4, %s2
  $region1: #{tpu_custom_call.1} parent=0
    #allocation3 [shape = 'u8[4096]{0}', space=vmem, size = 0x1000, scoped, tag = 'input window, operand 0, single buffered']
    #allocation4 [shape = 's32[1]{0}', space=sflag, size = 0x4, scoped, tag = 'scoped memory for tpu_custom_call.1']
    #allocation5 [shape = 's32[1]{0}', space=sflag, size = 0x4, scoped, tag = 'scoped memory for tpu_custom_call.1']
    #allocation6 [shape = 'u8[4096]{0}', space=vmem, size = 0x1000, scoped, tag = 'output window, operand 0, single buffered']
    %6 = vsyncpa [#allocation4], 0
    %7 = vsyncpa [#allocation5], 0
    // Predicated region
    $region2: #{tpu_custom_call.1} parent=1 // pred_check
      _
    $region3: #{tpu_custom_call.1} parent=1 // pred_check_branch
      %9 = sbr.rel (0) target = $region5
    $region4: #{tpu_custom_call.1} parent=1 // pred_region
      %s10 = sadd.s32 0, 0
      %p11 = scmp.lt.s32.totalorder %s10, 0
      %s12 = scalar_select %p11, %s10, 0
      %s13 = smul.u32 2, %s12
      %15 = vsyncadd [#allocation4], 0
      %s16 = smul.addr %s13, 4
      %s17 = scalar_lea.hbm %s0, %s16
      %s19 = sshll.u32 %s17, 4
      %s20 = int_to_ptr.hbm [resolvable:$true] %s19
      %s21 = sshll.u32 [#allocation3], 4
      %s22 = int_to_ptr.vmem [resolvable:$true] %s21
      %24 = dma.hbm_to_vmem [thread:$0]  %s20, 128, %s22, [#allocation4]
    $region5: #{tpu_custom_call.1} parent=1 // pred_fallthru
      _
    // Predicated region
    $region6: #{tpu_custom_call.1} parent=1 // pred_check
      _
    $region7: #{tpu_custom_call.1} parent=1 // pred_check_branch
      %26 = sbr.rel (0) target = $region9
    $region8: #{tpu_custom_call.1} parent=1 // pred_region
      %28 = dma.done [#allocation4], 128
    $region9: #{tpu_custom_call.1} parent=1 // pred_fallthru
      _
    %s29 = sadd.s32 0, 0
    %p30 = scmp.lt.s32.totalorder %s29, 0
    %s31 = scalar_select %p30, %s29, 0
    %s32 = smul.u32 2, %s31
    %p34 = scmp.eq.s32.totalorder 0, 0
    // Predicated region
    $region10: #{tpu_custom_call.1} parent=1 // pred_check
      %p35 = pneg %p34
    $region11: #{tpu_custom_call.1} parent=1 // pred_check_branch
      %37 = sbr.rel (%p35) target = $region13
    $region12: #{tpu_custom_call.1} parent=1 // pred_region
      %vm38 = vcmask 64512
      %39 = vst.msk [vmem:[#allocation2] sm:$0xff] %vm38, 0.0
    $region13: #{tpu_custom_call.1} parent=1 // pred_fallthru
      _
    %v40 = vld [vmem:[#allocation3] sm:$0xff]
    %v41 = vld [vmem:[#allocation2] sm:$0xff]
    %v43 = vunpack.c.l.b16 %v40
    %v44 = vunpack.c.h.b16 %v40
    %v45 = vpack.c.b16 %v43, %v43
    %v46 = vpack.c.b16 %v44, %v44
    %49 = vmatpush.bf16.xpose.msra.mxu0 0
    %50 = vmatpush.bf16.xpose.msra.mxu0 0
    %51 = vmatpush.bf16.xpose.msra.mxu0 0
    %52 = vmatpush.bf16.xpose.msra.mxu0 0
    %53 = vmatpush.bf16.xpose.msra.mxu0 0
    %54 = vmatpush.bf16.xpose.msra.mxu0 0
    %55 = vmatpush.bf16.xpose.msra.mxu0 0
    %56 = vmatpush.bf16.xpose.msra.mxu0 %v45
    %57 = vmatmul.bf16.gmra.mxu0 %v45
    %v58 = vpop.f32.mrf.mxu0
    %v59 = vadd.f32 0.0, %v58
    %v60 = vpop.f32.mrf.mxu0
    %61 = vdwg.mxu0
    %62 = vmatpush.bf16.xpose.msra.mxu0 0
    %63 = vmatpush.bf16.xpose.msra.mxu0 0
    %64 = vmatpush.bf16.xpose.msra.mxu0 0
    %65 = vmatpush.bf16.xpose.msra.mxu0 0
    %66 = vmatpush.bf16.xpose.msra.mxu0 0
    %67 = vmatpush.bf16.xpose.msra.mxu0 0
    %68 = vmatpush.bf16.xpose.msra.mxu0 0
    %69 = vmatpush.bf16.xpose.msra.mxu0 %v46
    %70 = vmatmul.bf16.gmra.mxu0 %v46
    %v71 = vpop.f32.mrf.mxu0
    %v72 = vadd.f32 %v59, %v71
    %v73 = vpop.f32.mrf.mxu0
    %74 = vdwg.mxu0
    %v75 = vadd.f32 %v41, %v72
    %vm76 = vcmask 64512
    %77 = vst.msk [vmem:[#allocation2] sm:$0xff] %vm76, %v75
    // Predicated region
    $region14: #{tpu_custom_call.1} parent=1 // pred_check
      %p78 = pneg %p34
    $region15: #{tpu_custom_call.1} parent=1 // pred_check_branch
      %80 = sbr.rel (%p78) target = $region17
    $region16: #{tpu_custom_call.1} parent=1 // pred_region
      %v81 = vld [vmem:[#allocation2] sm:$0xff]
      %82 = vst.msk [vmem:[#allocation6] sm:$0xff] %vm76, %v81
    $region17: #{tpu_custom_call.1} parent=1 // pred_fallthru
      _
    // Predicated region
    $region18: #{tpu_custom_call.1} parent=1 // pred_check
      _
    $region19: #{tpu_custom_call.1} parent=1 // pred_check_branch
      %84 = sbr.rel (0) target = $region21
    $region20: #{tpu_custom_call.1} parent=1 // pred_region
      %86 = vsyncadd [#allocation5], 0
      %s88 = sshll.u32 [#allocation6], 4
      %s89 = int_to_ptr.vmem [resolvable:$true] %s88
      %s90 = sshll.u32 %s1, 4
      %s91 = int_to_ptr.hbm [resolvable:$true] %s90
      %93 = dma.vmem_to_hbm [thread:$0]  %s89, 128, %s91, [#allocation5]
    $region21: #{tpu_custom_call.1} parent=1 // pred_fallthru
      _
    // Predicated region
    $region22: #{tpu_custom_call.1} parent=1 // pred_check
      _
    $region23: #{tpu_custom_call.1} parent=1 // pred_check_branch
      %95 = sbr.rel (0) target = $region25
    $region24: #{tpu_custom_call.1} parent=1 // pred_region
      %97 = dma.done [#allocation5], 128
    $region25: #{tpu_custom_call.1} parent=1 // pred_fallthru
      _
    %98 = vsyncpa [#allocation4], 1
    %99 = vsyncpa [#allocation5], 1

</llo_original>
